<compile_context>
chip_gen: v7x
topology: tpu7x:2x2x1
jax: 0.10.0
libtpu: 0.0.40
codegen_flags: <defaults>
</compile_context>

<pallas_src>
import jax
import jax.numpy as jnp
from jax import lax
from jax.experimental import pallas as pl
from jax.experimental.pallas import tpu as pltpu  # noqa: F401  (TPU backend)

INPUT_SIZE = 4
HIDDEN = 10
OUT = 1
BN_EPS = 1e-5


def net_kernel(xt_ref, p_ref, ot_ref):
    xt = xt_ref[...]                      # (4, N)  f32, batch on the lane axis
    p = p_ref[...]                        # (16, 128) packed parameters

    w2 = p[0:HIDDEN, 4:5]                 # (10, 1)
    g1 = p[0:HIDDEN, 5:6]                 # (10, 1)
    be1 = p[0:HIDDEN, 6:7]                # (10, 1)
    g2 = p[HIDDEN:HIDDEN + 1, 0:1]        # (1, 1)
    be2 = p[HIDDEN:HIDDEN + 1, 1:2]       # (1, 1)

    # fn1: Linear(4 -> 10) as 4 unrolled broadcast FMAs on the VPU.
    # h^T[j, n] = sum_k w1[k, j] * x^T[k, n]
    # (bias b1 omitted: exactly cancelled by bn1's batch-mean subtraction)
    ht = p[0:HIDDEN, 0:1] * xt[0:1, :]                      # (10, N)
    for k in range(1, INPUT_SIZE):
        ht = ht + p[0:HIDDEN, k:k + 1] * xt[k:k + 1, :]

    # bn1: training-mode batch stats (biased variance), folded into one FMA.
    mu1 = jnp.mean(ht, axis=1, keepdims=True)               # (10, 1)
    d1 = ht - mu1
    var1 = jnp.mean(d1 * d1, axis=1, keepdims=True)         # (10, 1)
    s1 = g1 * lax.rsqrt(var1 + BN_EPS)
    # relu fused with the BN FMA
    ht = jnp.maximum(s1 * d1 + be1, 0.0)                    # (10, N)

    # fn2: Linear(10 -> 1) as a weighted sublane reduction (bias b2 omitted).
    zt = jnp.sum(w2 * ht, axis=0, keepdims=True)            # (1, N)

    # bn2: training-mode batch stats, folded into one FMA.
    mu2 = jnp.mean(zt, axis=1, keepdims=True)               # (1, 1)
    d2 = zt - mu2
    var2 = jnp.mean(d2 * d2, axis=1, keepdims=True)
    s2 = g2 * lax.rsqrt(var2 + BN_EPS)
    zn = s2 * d2 + be2                                      # (1, N)

    # sigmoid(z) == 0.5*tanh(0.5*z) + 0.5  (EUP, overflow-safe)
    ot_ref[...] = 0.5 * jnp.tanh(0.5 * zn) + 0.5


def pack_params(params):
    """Pack all needed parameters into one (16,128) f32 block (single DMA).

    Layout (row = sublane / hidden channel, col = lane):
      rows 0..9, cols 0..3 : w1^T  (hidden x in)
      rows 0..9, col 4     : w2[:, 0]
      rows 0..9, col 5     : bn1 gamma
      rows 0..9, col 6     : bn1 beta
      row 10,    col 0     : bn2 gamma
      row 10,    col 1     : bn2 beta
    b1/b2 are intentionally dropped (cancelled by training-mode BatchNorm).
    """
    w1, b1, g1, be1, w2, b2, g2, be2 = params
    del b1, b2  # mathematically dead under training-mode BatchNorm
    p = jnp.zeros((16, 128), jnp.float32)
    p = p.at[:HIDDEN, :INPUT_SIZE].set(w1.T)
    p = p.at[:HIDDEN, 4].set(w2[:, 0])
    p = p.at[:HIDDEN, 5].set(g1.reshape(-1))
    p = p.at[:HIDDEN, 6].set(be1.reshape(-1))
    p = p.at[HIDDEN, 0].set(g2[0, 0])
    p = p.at[HIDDEN, 1].set(be2[0, 0])
    return p


@jax.jit
def net_forward(x, params):
    """x: (N, 4) float32 -> (N, 1) float32 (training-mode BatchNorm)."""
    n = x.shape[0]
    xt = x.T                                   # (4, N): batch on the lane axis
    p = pack_params(params)

    full = lambda shape: pl.BlockSpec(shape, lambda: (0,) * len(shape))
    # NOTE: single grid step; every activation fits comfortably in VMEM at any
    # reasonable batch for this tiny model.  For very large N, a batch grid
    # with a two-pass BatchNorm (sum / sum-of-squares accumulation, then a
    # normalization pass) would be the next step.
    out_t = pl.pallas_call(
        net_kernel,
        out_shape=jax.ShapeDtypeStruct((OUT, n), jnp.float32),
        in_specs=[full(xt.shape), full(p.shape)],
        out_specs=full((OUT, n)),
    )(xt, p)
    return out_t.T                             # back to (N, 1)


def init_params(key):
    """Deterministic PyTorch-style init. Linear weights stored as (in, out)."""
    k1, k2, k3, k4 = jax.random.split(key, 4)
    bound1 = 1.0 / jnp.sqrt(INPUT_SIZE)
    bound2 = 1.0 / jnp.sqrt(HIDDEN)
    w1 = jax.random.uniform(k1, (INPUT_SIZE, HIDDEN), jnp.float32, -bound1, bound1)
    b1 = jax.random.uniform(k2, (1, HIDDEN), jnp.float32, -bound1, bound1)
    w2 = jax.random.uniform(k3, (HIDDEN, OUT), jnp.float32, -bound2, bound2)
    b2 = jax.random.uniform(k4, (1, OUT), jnp.float32, -bound2, bound2)
    g1 = jnp.ones((1, HIDDEN), jnp.float32)
    be1 = jnp.zeros((1, HIDDEN), jnp.float32)
    g2 = jnp.ones((1, OUT), jnp.float32)
    be2 = jnp.zeros((1, OUT), jnp.float32)
    return (w1, b1, g1, be1, w2, b2, g2, be2)


def net_reference(x, params):
    """Pure-JAX reference with the full PyTorch math (biases included)."""
    w1, b1, g1, be1, w2, b2, g2, be2 = params
    h = x @ w1 + b1
    mu1 = h.mean(0, keepdims=True)
    var1 = ((h - mu1) ** 2).mean(0, keepdims=True)
    h = (h - mu1) / jnp.sqrt(var1 + BN_EPS) * g1 + be1
    h = jnp.maximum(h, 0.0)
    z = h @ w2 + b2
    mu2 = z.mean(0, keepdims=True)
    var2 = ((z - mu2) ** 2).mean(0, keepdims=True)
    z = (z - mu2) / jnp.sqrt(var2 + BN_EPS) * g2 + be2
    return jax.nn.sigmoid(z)


if __name__ == "__main__":
    key = jax.random.PRNGKey(0)
    kx, kp = jax.random.split(key)

    N = 128  # lane-dense batch (>1 required for training-mode BatchNorm)
    x = jax.random.normal(kx, (N, INPUT_SIZE), jnp.float32)
    params = init_params(kp)

    out = net_forward(x, params)
    out = jax.block_until_ready(out)

    ref = net_reference(x, params)
    assert out.shape == (N, OUT), out.shape
    assert jnp.allclose(out, ref, atol=1e-5, rtol=1e-5), (out, ref)

    print("KERNEL_OK")
</pallas_src>

<mosaic_0001>
module attributes {stable_mosaic.version = 11 : i64} {
  func.func @net_kernel(%arg0: memref<4x128xf32, #tpu.memory_space<vmem>>, %arg1: memref<16x128xf32, #tpu.memory_space<vmem>>, %arg2: memref<1x128xf32, #tpu.memory_space<vmem>>) attributes {dimension_semantics = [], scalar_prefetch = 0 : i64, scratch_operands = 0 : i64, tpu.core_type = #tpu.core_type<tc>} {
    %c0 = arith.constant 0 : index
    %c0_0 = arith.constant 0 : index
    %0 = vector.load %arg0[%c0, %c0_0] : memref<4x128xf32, #tpu.memory_space<vmem>>, vector<4x128xf32>
    %c0_1 = arith.constant 0 : index
    %c0_2 = arith.constant 0 : index
    %1 = vector.load %arg1[%c0_1, %c0_2] : memref<16x128xf32, #tpu.memory_space<vmem>>, vector<16x128xf32>
    %2 = vector.extract_strided_slice %1 {offsets = [0, 4], sizes = [10, 1], strides = [1, 1]} : vector<16x128xf32> to vector<10x1xf32>
    %3 = vector.extract_strided_slice %1 {offsets = [0, 5], sizes = [10, 1], strides = [1, 1]} : vector<16x128xf32> to vector<10x1xf32>
    %4 = vector.extract_strided_slice %1 {offsets = [0, 6], sizes = [10, 1], strides = [1, 1]} : vector<16x128xf32> to vector<10x1xf32>
    %5 = vector.extract_strided_slice %1 {offsets = [10, 0], sizes = [1, 1], strides = [1, 1]} : vector<16x128xf32> to vector<1x1xf32>
    %6 = vector.extract_strided_slice %1 {offsets = [10, 1], sizes = [1, 1], strides = [1, 1]} : vector<16x128xf32> to vector<1x1xf32>
    %7 = vector.extract_strided_slice %1 {offsets = [0, 0], sizes = [10, 1], strides = [1, 1]} : vector<16x128xf32> to vector<10x1xf32>
    %8 = vector.extract_strided_slice %0 {offsets = [0, 0], sizes = [1, 128], strides = [1, 1]} : vector<4x128xf32> to vector<1x128xf32>
    %9 = vector.broadcast %7 : vector<10x1xf32> to vector<10x128xf32>
    %10 = vector.broadcast %8 : vector<1x128xf32> to vector<10x128xf32>
    %11 = arith.mulf %9, %10 : vector<10x128xf32>
    %12 = vector.extract_strided_slice %1 {offsets = [0, 1], sizes = [10, 1], strides = [1, 1]} : vector<16x128xf32> to vector<10x1xf32>
    %13 = vector.extract_strided_slice %0 {offsets = [1, 0], sizes = [1, 128], strides = [1, 1]} : vector<4x128xf32> to vector<1x128xf32>
    %14 = vector.broadcast %12 : vector<10x1xf32> to vector<10x128xf32>
    %15 = vector.broadcast %13 : vector<1x128xf32> to vector<10x128xf32>
    %16 = arith.mulf %14, %15 : vector<10x128xf32>
    %17 = arith.addf %11, %16 : vector<10x128xf32>
    %18 = vector.extract_strided_slice %1 {offsets = [0, 2], sizes = [10, 1], strides = [1, 1]} : vector<16x128xf32> to vector<10x1xf32>
    %19 = vector.extract_strided_slice %0 {offsets = [2, 0], sizes = [1, 128], strides = [1, 1]} : vector<4x128xf32> to vector<1x128xf32>
    %20 = vector.broadcast %18 : vector<10x1xf32> to vector<10x128xf32>
    %21 = vector.broadcast %19 : vector<1x128xf32> to vector<10x128xf32>
    %22 = arith.mulf %20, %21 : vector<10x128xf32>
    %23 = arith.addf %17, %22 : vector<10x128xf32>
    %24 = vector.extract_strided_slice %1 {offsets = [0, 3], sizes = [10, 1], strides = [1, 1]} : vector<16x128xf32> to vector<10x1xf32>
    %25 = vector.extract_strided_slice %0 {offsets = [3, 0], sizes = [1, 128], strides = [1, 1]} : vector<4x128xf32> to vector<1x128xf32>
    %26 = vector.broadcast %24 : vector<10x1xf32> to vector<10x128xf32>
    %27 = vector.broadcast %25 : vector<1x128xf32> to vector<10x128xf32>
    %28 = arith.mulf %26, %27 : vector<10x128xf32>
    %29 = arith.addf %23, %28 : vector<10x128xf32>
    %cst = arith.constant dense<0.000000e+00> : vector<10xf32>
    %30 = vector.multi_reduction <add>, %29, %cst [1] : vector<10x128xf32> to vector<10xf32>
    %31 = vector.shape_cast %30 : vector<10xf32> to vector<10x1xf32>
    %cst_3 = arith.constant 1.280000e+02 : f32
    %32 = vector.broadcast %cst_3 : f32 to vector<10x1xf32>
    %33 = arith.divf %31, %32 : vector<10x1xf32>
    %34 = vector.broadcast %33 : vector<10x1xf32> to vector<10x128xf32>
    %35 = arith.subf %29, %34 : vector<10x128xf32>
    %36 = arith.mulf %35, %35 : vector<10x128xf32>
    %cst_4 = arith.constant dense<0.000000e+00> : vector<10xf32>
    %37 = vector.multi_reduction <add>, %36, %cst_4 [1] : vector<10x128xf32> to vector<10xf32>
    %38 = vector.shape_cast %37 : vector<10xf32> to vector<10x1xf32>
    %cst_5 = arith.constant 1.280000e+02 : f32
    %39 = vector.broadcast %cst_5 : f32 to vector<10x1xf32>
    %40 = arith.divf %38, %39 : vector<10x1xf32>
    %cst_6 = arith.constant 9.99999974E-6 : f32
    %41 = vector.broadcast %cst_6 : f32 to vector<10x1xf32>
    %42 = arith.addf %40, %41 : vector<10x1xf32>
    %43 = math.rsqrt %42 : vector<10x1xf32>
    %44 = arith.mulf %3, %43 : vector<10x1xf32>
    %45 = vector.broadcast %44 : vector<10x1xf32> to vector<10x128xf32>
    %46 = arith.mulf %45, %35 : vector<10x128xf32>
    %47 = vector.broadcast %4 : vector<10x1xf32> to vector<10x128xf32>
    %48 = arith.addf %46, %47 : vector<10x128xf32>
    %cst_7 = arith.constant 0.000000e+00 : f32
    %49 = vector.broadcast %cst_7 : f32 to vector<10x128xf32>
    %50 = arith.maximumf %48, %49 : vector<10x128xf32>
    %51 = vector.broadcast %2 : vector<10x1xf32> to vector<10x128xf32>
    %52 = arith.mulf %51, %50 : vector<10x128xf32>
    %cst_8 = arith.constant dense<0.000000e+00> : vector<128xf32>
    %53 = vector.multi_reduction <add>, %52, %cst_8 [0] : vector<10x128xf32> to vector<128xf32>
    %54 = vector.shape_cast %53 : vector<128xf32> to vector<1x128xf32>
    %cst_9 = arith.constant dense<0.000000e+00> : vector<1xf32>
    %55 = vector.multi_reduction <add>, %54, %cst_9 [1] : vector<1x128xf32> to vector<1xf32>
    %56 = vector.shape_cast %55 : vector<1xf32> to vector<1x1xf32>
    %cst_10 = arith.constant 1.280000e+02 : f32
    %57 = vector.broadcast %cst_10 : f32 to vector<1x1xf32>
    %58 = arith.divf %56, %57 : vector<1x1xf32>
    %59 = vector.broadcast %58 : vector<1x1xf32> to vector<1x128xf32>
    %60 = arith.subf %54, %59 : vector<1x128xf32>
    %61 = arith.mulf %60, %60 : vector<1x128xf32>
    %cst_11 = arith.constant dense<0.000000e+00> : vector<1xf32>
    %62 = vector.multi_reduction <add>, %61, %cst_11 [1] : vector<1x128xf32> to vector<1xf32>
    %63 = vector.shape_cast %62 : vector<1xf32> to vector<1x1xf32>
    %cst_12 = arith.constant 1.280000e+02 : f32
    %64 = vector.broadcast %cst_12 : f32 to vector<1x1xf32>
    %65 = arith.divf %63, %64 : vector<1x1xf32>
    %cst_13 = arith.constant 9.99999974E-6 : f32
    %66 = vector.broadcast %cst_13 : f32 to vector<1x1xf32>
    %67 = arith.addf %65, %66 : vector<1x1xf32>
    %68 = math.rsqrt %67 : vector<1x1xf32>
    %69 = arith.mulf %5, %68 : vector<1x1xf32>
    %70 = vector.broadcast %69 : vector<1x1xf32> to vector<1x128xf32>
    %71 = arith.mulf %70, %60 : vector<1x128xf32>
    %72 = vector.broadcast %6 : vector<1x1xf32> to vector<1x128xf32>
    %73 = arith.addf %71, %72 : vector<1x128xf32>
    %cst_14 = arith.constant 5.000000e-01 : f32
    %74 = vector.broadcast %cst_14 : f32 to vector<1x128xf32>
    %75 = arith.mulf %74, %73 : vector<1x128xf32>
    %76 = math.tanh %75 : vector<1x128xf32>
    %cst_15 = arith.constant 5.000000e-01 : f32
    %77 = vector.broadcast %cst_15 : f32 to vector<1x128xf32>
    %78 = arith.mulf %77, %76 : vector<1x128xf32>
    %cst_16 = arith.constant 5.000000e-01 : f32
    %79 = vector.broadcast %cst_16 : f32 to vector<1x128xf32>
    %80 = arith.addf %78, %79 : vector<1x128xf32>
    %c0_17 = arith.constant 0 : index
    %c0_18 = arith.constant 0 : index
    %81 = vector.load %arg2[%c0_17, %c0_18] : memref<1x128xf32, #tpu.memory_space<vmem>>, vector<1x128xf32>
    tpu.vector_store %arg2[%c0_17, %c0_18], %80 {strides = array<i32>} : memref<1x128xf32, #tpu.memory_space<vmem>>, vector<1x128xf32>,
    return
  }
}

</mosaic_0001>

<llo_original>
// kernel: net_forward.1
$region0: #{net_forward.1}
  #allocation0 [shape = 'u32[]', space=smem, size = 0x4, offset = 0x4, fixed_abs, tag = 'smem constant byte address 0x4 - core index']
  #allocation1 [shape = 'u32[144,128]{1,0:T(1,128)}', space=vmem, size = 0x12000, scoped, tag = 'internal scratch']
  %s0 = inlined_call_operand.vmem [shape: f32[4,128], index: 0, kind: input, shape index: {}]
  %s1 = inlined_call_operand.vmem [shape: f32[16,128], index: 1, kind: input, shape index: {}]
  %s2 = inlined_call_operand.hbm [shape: f32[1,128], index: 2, kind: output, shape index: {}]
  %s3 = sld [smem:[#allocation0]]
  $region18: #{net_forward.1} parent=0
    _
  %s5 = ssub.s32 1, %s3
  %s6 = scalar_select 0, %s5, %s3
  $region1: #{net_forward.1} parent=0
    #allocation2 [shape = 'u8[512]{0}', space=vmem, size = 0x400, scoped, tag = 'output window, operand 0, single buffered']
    #allocation3 [shape = 's32[1]{0}', space=sflag, size = 0x4, scoped, tag = 'scoped memory for net_forward.1']
    %7 = vsyncpa [#allocation3], 0
    // Predicated region
    $region2: #{net_forward.1} parent=1 // pred_check
      _
    $region3: #{net_forward.1} parent=1 // pred_check_branch
      %9 = sbr.rel (0) target = $region5
    $region4: #{net_forward.1} parent=1 // pred_region
      _
    $region5: #{net_forward.1} parent=1 // pred_fallthru
      _
    // Predicated region
    $region6: #{net_forward.1} parent=1 // pred_check
      _
    $region7: #{net_forward.1} parent=1 // pred_check_branch
      %11 = sbr.rel (0) target = $region9
    $region8: #{net_forward.1} parent=1 // pred_region
      _
    $region9: #{net_forward.1} parent=1 // pred_fallthru
      _
    %v12 = vld [vmem:[%s0] sm:$0xf]
    %v13 = vld [vmem:[%s1] sm:$0xff]
    %v14 = vld [vmem:[%s1 + $0x8] sm:$0xff]
    %16 = vset.pattern.permute.xlu0 0
    %17 = vperm.xlu0 %16, %v13
    %v18 = vpop.permute.xlu0 %17
    %21 = vset.pattern.permute.xlu0 0
    %22 = vperm.xlu0 %21, %v14
    %v23 = vpop.permute.xlu0 %22
    %v25 = vlaneseq
    %v26 = vshrl.u32 %v25, 7
    %v27 = vsub.s32 0, %v26
    %v28 = vrot.slane %v12, %v27
    %v29 = vmul.f32 %v18, %v28
    %v30 = vmul.f32 %v23, %v28
    %31 = vset.pattern.permute.xlu0 1
    %32 = vperm.xlu0 %31, %v13
    %v33 = vpop.permute.xlu0 %32
    %35 = vset.pattern.permute.xlu0 1
    %36 = vperm.xlu0 %35, %v14
    %v37 = vpop.permute.xlu0 %36
    %v39 = vlaneseq
    %v40 = vshrl.u32 %v39, 7
    %v41 = vsub.s32 1, %v40
    %v42 = vrot.slane %v12, %v41
    %v43 = vmul.f32 %v33, %v42
    %v44 = vmul.f32 %v37, %v42
    %v45 = vadd.f32 %v29, %v43
    %v46 = vadd.f32 %v30, %v44
    %47 = vset.pattern.permute.xlu0 2
    %48 = vperm.xlu0 %47, %v13
    %v49 = vpop.permute.xlu0 %48
    %51 = vset.pattern.permute.xlu0 2
    %52 = vperm.xlu0 %51, %v14
    %v53 = vpop.permute.xlu0 %52
    %v55 = vlaneseq
    %v56 = vshrl.u32 %v55, 7
    %v57 = vsub.s32 2, %v56
    %v58 = vrot.slane %v12, %v57
    %v59 = vmul.f32 %v49, %v58
    %v60 = vmul.f32 %v53, %v58
    %v61 = vadd.f32 %v45, %v59
    %v62 = vadd.f32 %v46, %v60
    %63 = vset.pattern.permute.xlu0 3
    %64 = vperm.xlu0 %63, %v13
    %v65 = vpop.permute.xlu0 %64
    %67 = vset.pattern.permute.xlu0 3
    %68 = vperm.xlu0 %67, %v14
    %v69 = vpop.permute.xlu0 %68
    %v71 = vlaneseq
    %v72 = vshrl.u32 %v71, 7
    %v73 = vsub.s32 3, %v72
    %v74 = vrot.slane %v12, %v73
    %v75 = vmul.f32 %v65, %v74
    %v76 = vmul.f32 %v69, %v74
    %v77 = vadd.f32 %v61, %v75
    %v78 = vadd.f32 %v62, %v76
    %79 = vadd.xlane.f32.xlu0 %v77
    %v80 = vpop.xlane.xlu0 %79
    %vm81 = vcmask 1041408
    %v82 = vsel %vm81, %v78, 0.0
    %83 = vadd.xlane.f32.xlu0 %v82
    %v84 = vpop.xlane.xlu0 %83
    %v85 = vrcp.pop 128.0
    %v86 = vmul.f32 %v80, %v85
    %v87 = vmul.f32 %v84, %v85
    %v88 = vsub.f32 %v77, %v86
    %v89 = vsub.f32 %v78, %v87
    %v90 = vmul.f32 %v88, %v88
    %v91 = vmul.f32 %v89, %v89
    %92 = vadd.xlane.f32.xlu0 %v90
    %v93 = vpop.xlane.xlu0 %92
    %v94 = vsel %vm81, %v91, 0.0
    %95 = vadd.xlane.f32.xlu0 %v94
    %v96 = vpop.xlane.xlu0 %95
    %v97 = vmul.f32 %v93, %v85
    %v98 = vmul.f32 %v96, %v85
    %v99 = vadd.f32 %v97, 1e-05
    %v100 = vadd.f32 %v98, 1e-05
    %v101 = vrsqrt.pop %v99
    %v102 = vrsqrt.pop %v100
    %v103 = vmul.f32 %v13, %v101
    %v104 = vmul.f32 %v14, %v102
    %106 = vset.pattern.permute.xlu0 5
    %107 = vperm.xlu0 %106, %v103
    %v108 = vpop.permute.xlu0 %107
    %111 = vset.pattern.permute.xlu0 5
    %112 = vperm.xlu0 %111, %v104
    %v113 = vpop.permute.xlu0 %112
    %v115 = vmul.f32 %v108, %v88
    %v116 = vmul.f32 %v113, %v89
    %117 = vset.pattern.permute.xlu0 6
    %118 = vperm.xlu0 %117, %v13
    %v119 = vpop.permute.xlu0 %118
    %121 = vset.pattern.permute.xlu0 6
    %122 = vperm.xlu0 %121, %v14
    %v123 = vpop.permute.xlu0 %122
    %v125 = vadd.f32 %v115, %v119
    %v126 = vadd.f32 %v116, %v123
    %v127 = vmax.f32 %v125, 0.0
    %v128 = vmax.f32 %v126, 0.0
    %129 = vset.pattern.permute.xlu0 4
    %130 = vperm.xlu0 %129, %v13
    %v131 = vpop.permute.xlu0 %130
    %133 = vset.pattern.permute.xlu0 4
    %134 = vperm.xlu0 %133, %v14
    %v135 = vpop.permute.xlu0 %134
    %v137 = vmul.f32 %v131, %v127
    %v138 = vmul.f32 %v135, %v128
    %v139 = vsel %vm81, %v138, 0.0
    %v140 = vadd.f32 %v137, %v139
    %v141 = vrot.slane %v140, 4
    %v142 = vadd.f32 %v140, %v141
    %v143 = vrot.slane %v142, 2
    %v144 = vadd.f32 %v142, %v143
    %v145 = vrot.slane %v144, 1
    %v146 = vadd.f32 %v144, %v145
    %147 = vadd.xlane.f32.xlu0 %v146
    %v148 = vpop.xlane.xlu0 %147
    %v149 = vmul.f32 %v148, %v85
    %v150 = vsub.f32 %v146, %v149
    %v151 = vmul.f32 %v150, %v150
    %152 = vadd.xlane.f32.xlu0 %v151
    %v153 = vpop.xlane.xlu0 %152
    %v154 = vmul.f32 %v153, %v85
    %v155 = vadd.f32 %v154, 1e-05
    %v156 = vrsqrt.pop %v155
    %v157 = vmul.f32 %v14, %v156
    %159 = vset.pattern.permute.xlu0 0
    %160 = vperm.xlu0 %159, %v157
    %v161 = vpop.permute.xlu0 %160
    %v163 = vmul.f32 %v161, %v150
    %v164 = vadd.f32 %v163, %v37
    %v165 = vmul.f32 %v164, 0.5
    %v166 = vtanh.pop %v165
    %v167 = vmul.f32 %v166, 0.5
    %v168 = vadd.f32 %v167, 0.5
    %169 = vst [vmem:[#allocation2 - $0x2] sm:$0x4] %v168
    // Predicated region
    $region10: #{net_forward.1} parent=1 // pred_check
      _
    $region11: #{net_forward.1} parent=1 // pred_check_branch
      %171 = sbr.rel (0) target = $region13
    $region12: #{net_forward.1} parent=1 // pred_region
      %s173 = ssub.s32 16, 16
      %174 = vsyncadd [#allocation3], %s173
      %s176 = sshll.u32 [#allocation2], 4
      %s177 = int_to_ptr.vmem [resolvable:$true] %s176
      %179 = dma.vmem_to_hbm [thread:$0]  %s177, 16, %s2, [#allocation3]
    $region13: #{net_forward.1} parent=1 // pred_fallthru
      _
    // Predicated region
    $region14: #{net_forward.1} parent=1 // pred_check
      _
    $region15: #{net_forward.1} parent=1 // pred_check_branch
      %181 = sbr.rel (0) target = $region17
    $region16: #{net_forward.1} parent=1 // pred_region
      %182 = dma.done [#allocation3], 16
    $region17: #{net_forward.1} parent=1 // pred_fallthru
      _
    %183 = vsyncpa [#allocation3], 1

</llo_original>
